<compile_context>
chip_gen: v7x
topology: tpu7x:2x2x1
jax: 0.10.0
libtpu: 0.0.40
codegen_flags: <defaults>
</compile_context>

<pallas_src>
import jax
import jax.numpy as jnp
from jax.experimental import pallas as pl
from jax.experimental.pallas import tpu as pltpu

_LANES = 128
_SUBLANES = 8
# Target double-buffered input+output block footprint / scoped-VMEM request.
_BLOCK_BUDGET_BYTES = 16 * 1024 * 1024
_VMEM_LIMIT_BYTES = 32 * 1024 * 1024
# Use the fully-unrolled VPU path only while C_in * C_out stays small.
_VPU_MAX_TERMS = 256


def _round_up(v, m):
    return ((v + m - 1) // m) * m


# ---------------------------------------------------------------------------
# Path A: small channels, sublane+lane-dense pixel layout (N, C, HW/128, 128).
# ---------------------------------------------------------------------------
def _vpu_kernel(x_ref, w_ref, b_ref, o_ref):
    # x_ref: (bn, C_in, sm, 128) VMEM   o_ref: (bn, C_out, sm, 128) VMEM
    # w_ref: (C_out, C_in) SMEM f32     b_ref: (C_out,) SMEM f32
    c_in = x_ref.shape[1]
    c_out = o_ref.shape[1]
    # Load every input channel once as dense (bn, sm, 128) tiles.
    xs = [x_ref[:, k].astype(jnp.float32) for k in range(c_in)]
    for o in range(c_out):
        acc = xs[0] * w_ref[o, 0]              # scalar-splat FMA chain (VPU only)
        for k in range(1, c_in):
            acc = acc + xs[k] * w_ref[o, k]
        acc = acc + b_ref[o]
        o_ref[:, o] = jnp.maximum(acc, 0.0).astype(o_ref.dtype)


def _vpu_call(x_nchw, w2d, bias, cost):
    N, C_in, H, W = x_nchw.shape
    C_out = w2d.shape[0]
    HW = H * W
    R = HW // _LANES
    dtype = x_nchw.dtype
    dtype_bytes = jnp.dtype(dtype).itemsize

    x4 = x_nchw.reshape(N, C_in, R, _LANES)       # free reshape, last dim contiguous
    w_smem = w2d.astype(jnp.float32)              # tiny, SMEM-resident
    b_smem = bias.reshape(C_out).astype(jnp.float32)

    # VMEM-budgeted tiling: fill the spatial axis first, then block over batch.
    per_unit = (C_in + C_out) * _LANES * dtype_bytes           # bn=1, sm=1, in+out
    max_units = max(1, _BLOCK_BUDGET_BYTES // (2 * per_unit))  # double-buffered
    sm = min(R, max_units)
    bn = 1
    if sm < R:
        sm = max(_SUBLANES, (sm // _SUBLANES) * _SUBLANES)
    else:
        sm = R
        bn = min(N, max(1, max_units // R))
        bn = pl.cdiv(N, pl.cdiv(N, bn))            # balance batch blocks
    # v7x megacore: expose >= 2 parallel grid steps whenever the data allows.
    if pl.cdiv(N, bn) * pl.cdiv(R, sm) == 1:
        if N > 1:
            bn = pl.cdiv(N, 2)
        elif R > _SUBLANES:
            sm = _round_up(pl.cdiv(R, 2), _SUBLANES)

    grid = (pl.cdiv(N, bn), pl.cdiv(R, sm))

    y = pl.pallas_call(
        _vpu_kernel,
        out_shape=jax.ShapeDtypeStruct((N, C_out, R, _LANES), dtype),
        grid_spec=pltpu.PrefetchScalarGridSpec(
            num_scalar_prefetch=0,
            grid=grid,
            in_specs=[
                pl.BlockSpec((bn, C_in, sm, _LANES), lambda n, r: (n, 0, r, 0)),
                pl.BlockSpec(memory_space=pltpu.MemorySpace.SMEM),
                pl.BlockSpec(memory_space=pltpu.MemorySpace.SMEM),
            ],
            out_specs=pl.BlockSpec((bn, C_out, sm, _LANES),
                                   lambda n, r: (n, 0, r, 0)),
        ),
        compiler_params=pltpu.CompilerParams(
            dimension_semantics=("parallel", "parallel"),
            vmem_limit_bytes=_VMEM_LIMIT_BYTES),
        cost_estimate=cost,
    )(x4, w_smem, b_smem)
    return y.reshape(N, C_out, H, W)


# ---------------------------------------------------------------------------
# Path B: general flat layout (N, C, HW) with MXU dot (or tiny-C_in FMA chain).
# ---------------------------------------------------------------------------
def _flat_kernel(x_ref, w_ref, b_ref, o_ref):
    # x_ref: (1, C_in, tm)  w_ref: (C_out, C_in)  b_ref: (C_out, 1)
    # o_ref: (1, C_out, tm)
    x = x_ref[0]
    w = w_ref[...]
    b = b_ref[...].astype(jnp.float32)
    c_in = w.shape[1]
    if c_in <= _SUBLANES:
        # Tiny contraction: broadcast-FMA chain on the VPU, skip the MXU.
        xf = x.astype(jnp.float32)
        wf = w.astype(jnp.float32)
        acc = wf[:, 0:1] * xf[0:1, :]
        for k in range(1, c_in):
            acc = acc + wf[:, k:k + 1] * xf[k:k + 1, :]
    else:
        # Native-dtype MXU operands (bf16 stays bf16 on v6e/v7x), f32 accumulate.
        acc = jax.lax.dot_general(
            w, x, (((1,), (0,)), ((), ())),
            preferred_element_type=jnp.float32)
    o_ref[0] = jnp.maximum(acc + b, 0.0).astype(o_ref.dtype)


def _flat_call(x_nchw, w2d, bias, cost):
    N, C_in, H, W = x_nchw.shape
    C_out = w2d.shape[0]
    HW = H * W
    dtype = x_nchw.dtype
    dtype_bytes = jnp.dtype(dtype).itemsize

    x_cm = x_nchw.reshape(N, C_in, HW)            # pure reshape, M contiguous
    b_col = bias.reshape(C_out, 1)

    # VMEM-budgeted lane tile (multiple of 128).
    per_lane = (C_in + C_out) * dtype_bytes
    tm_cap = max(_LANES,
                 (_BLOCK_BUDGET_BYTES // (2 * per_lane) // _LANES) * _LANES)
    tm = min(tm_cap, _round_up(HW, _LANES))
    # v7x megacore: expose >= 2 parallel grid steps when possible.
    if N == 1 and tm >= HW and HW > _LANES:
        tm = _round_up(pl.cdiv(HW, 2), _LANES)

    grid = (N, pl.cdiv(HW, tm))

    y = pl.pallas_call(
        _flat_kernel,
        out_shape=jax.ShapeDtypeStruct((N, C_out, HW), dtype),
        grid_spec=pltpu.PrefetchScalarGridSpec(
            num_scalar_prefetch=0,
            grid=grid,
            in_specs=[
                pl.BlockSpec((1, C_in, tm), lambda n, i: (n, 0, i)),
                pl.BlockSpec((C_out, C_in), lambda n, i: (0, 0)),
                pl.BlockSpec((C_out, 1), lambda n, i: (0, 0)),
            ],
            out_specs=pl.BlockSpec((1, C_out, tm), lambda n, i: (n, 0, i)),
        ),
        compiler_params=pltpu.CompilerParams(
            dimension_semantics=("parallel", "parallel"),
            vmem_limit_bytes=_VMEM_LIMIT_BYTES),
        cost_estimate=cost,
    )(x_cm, w2d, b_col)
    return y.reshape(N, C_out, H, W)


# ---------------------------------------------------------------------------
# Public entry point: SkipConv.forward == relu(conv1x1(x) + bias)
# ---------------------------------------------------------------------------
def skip_conv_pallas(x_nchw, weight, bias):
    """x: (N, C_in, H, W); weight: (C_out, C_in[,1,1]); bias: (C_out,)."""
    N, C_in, H, W = x_nchw.shape
    C_out = bias.shape[0]
    HW = H * W
    w2d = weight.reshape(C_out, C_in)
    dtype_bytes = jnp.dtype(x_nchw.dtype).itemsize

    cost = pl.CostEstimate(
        flops=2 * N * HW * C_in * C_out,
        transcendentals=0,
        bytes_accessed=N * HW * (C_in + C_out) * dtype_bytes
        + (C_out * C_in + C_out) * 4)

    if C_in * C_out <= _VPU_MAX_TERMS and HW % _LANES == 0:
        return _vpu_call(x_nchw, w2d, bias, cost)
    return _flat_call(x_nchw, w2d, bias, cost)


if __name__ == "__main__":
    key = jax.random.PRNGKey(0)
    k_x, k_w, k_b = jax.random.split(key, 3)

    # --- primary shapes implied by the module: batch=2, ch 4->8, 16x16 ---
    N, C_in, C_out, H, W = 2, 4, 8, 16, 16
    x = jax.random.normal(k_x, (N, C_in, H, W), dtype=jnp.float32)
    # nn.Conv2d(in_ch, out_ch, 1) weight is (out_ch, in_ch, 1, 1).
    weight = jax.random.normal(k_w, (C_out, C_in, 1, 1), dtype=jnp.float32) * 0.1
    bias = jax.random.normal(k_b, (C_out,), dtype=jnp.float32) * 0.1

    y = skip_conv_pallas(x, weight, bias)
    jax.block_until_ready(y)

    ref = jnp.einsum("nchw,oc->nohw", x, weight[:, :, 0, 0]) \
        + bias[None, :, None, None]
    ref = jnp.maximum(ref, 0.0)
    assert y.shape == (N, C_out, H, W)
    assert jnp.allclose(y, ref, atol=1e-5, rtol=1e-5)

    # --- flat-layout fallback (HW not a multiple of 128), VPU branch ---
    x2 = jax.random.normal(k_x, (1, 4, 12, 12), dtype=jnp.float32)
    w2 = jax.random.normal(k_w, (8, 4, 1, 1), dtype=jnp.float32) * 0.1
    b2 = jax.random.normal(k_b, (8,), dtype=jnp.float32) * 0.1
    y2 = skip_conv_pallas(x2, w2, b2)
    ref2 = jnp.maximum(
        jnp.einsum("nchw,oc->nohw", x2, w2[:, :, 0, 0])
        + b2[None, :, None, None], 0.0)
    assert jnp.allclose(y2, ref2, atol=1e-5, rtol=1e-5)

    # --- flat-layout MXU branch (larger channel counts) ---
    x3 = jax.random.normal(k_x, (1, 32, 16, 16), dtype=jnp.float32)
    w3 = jax.random.normal(k_w, (16, 32, 1, 1), dtype=jnp.float32) * 0.1
    b3 = jax.random.normal(k_b, (16,), dtype=jnp.float32) * 0.1
    y3 = skip_conv_pallas(x3, w3, b3)
    ref3 = jnp.maximum(
        jnp.einsum("nchw,oc->nohw", x3, w3[:, :, 0, 0])
        + b3[None, :, None, None], 0.0)
    # Looser tolerance: MXU f32 matmul pass configuration may differ slightly
    # from the XLA einsum reference at default precision.
    assert jnp.allclose(y3, ref3, atol=1e-2, rtol=1e-2)
    jax.block_until_ready((y2, y3))

    print("KERNEL_OK")
</pallas_src>

<mosaic_0001>
module attributes {stable_mosaic.version = 11 : i64} {
  func.func @_vpu_kernel(%arg0: i32, %arg1: i32, %arg2: memref<1x4x2x128xf32, #tpu.memory_space<vmem>>, %arg3: memref<8x4xf32, #tpu.memory_space<smem>>, %arg4: memref<8xf32, #tpu.memory_space<smem>>, %arg5: memref<1x8x2x128xf32, #tpu.memory_space<vmem>>) attributes {dimension_semantics = [#tpu.dimension_semantics<parallel>, #tpu.dimension_semantics<parallel>], iteration_bounds = array<i64: 2, 1>, scalar_prefetch = 0 : i64, scratch_operands = 0 : i64, tpu.core_type = #tpu.core_type<tc>, window_params = [{transform_indices = @transform_0, window_bounds = array<i64: 1, 4, 2, 128>}, {transform_indices = @transform_1, window_bounds = array<i64: 8, 4>}, {transform_indices = @transform_2, window_bounds = array<i64: 8>}, {transform_indices = @transform_3, window_bounds = array<i64: 1, 8, 2, 128>}]} {
    %c0 = arith.constant 0 : index
    %c0_0 = arith.constant 0 : index
    %c0_1 = arith.constant 0 : index
    %c0_2 = arith.constant 0 : index
    %0 = vector.load %arg2[%c0, %c0_0, %c0_1, %c0_2] : memref<1x4x2x128xf32, #tpu.memory_space<vmem>>, vector<1x1x2x128xf32>
    %1 = vector.shape_cast %0 : vector<1x1x2x128xf32> to vector<1x2x128xf32>
    %c0_3 = arith.constant 0 : index
    %c1 = arith.constant 1 : index
    %c0_4 = arith.constant 0 : index
    %c0_5 = arith.constant 0 : index
    %2 = vector.load %arg2[%c0_3, %c1, %c0_4, %c0_5] : memref<1x4x2x128xf32, #tpu.memory_space<vmem>>, vector<1x1x2x128xf32>
    %3 = vector.shape_cast %2 : vector<1x1x2x128xf32> to vector<1x2x128xf32>
    %c0_6 = arith.constant 0 : index
    %c2 = arith.constant 2 : index
    %c0_7 = arith.constant 0 : index
    %c0_8 = arith.constant 0 : index
    %4 = vector.load %arg2[%c0_6, %c2, %c0_7, %c0_8] : memref<1x4x2x128xf32, #tpu.memory_space<vmem>>, vector<1x1x2x128xf32>
    %5 = vector.shape_cast %4 : vector<1x1x2x128xf32> to vector<1x2x128xf32>
    %c0_9 = arith.constant 0 : index
    %c3 = arith.constant 3 : index
    %c0_10 = arith.constant 0 : index
    %c0_11 = arith.constant 0 : index
    %6 = vector.load %arg2[%c0_9, %c3, %c0_10, %c0_11] : memref<1x4x2x128xf32, #tpu.memory_space<vmem>>, vector<1x1x2x128xf32>
    %7 = vector.shape_cast %6 : vector<1x1x2x128xf32> to vector<1x2x128xf32>
    %c0_12 = arith.constant 0 : index
    %c0_13 = arith.constant 0 : index
    %8 = memref.load %arg3[%c0_12, %c0_13] : memref<8x4xf32, #tpu.memory_space<smem>>
    %9 = vector.broadcast %8 : f32 to vector<1x2x128xf32>
    %10 = arith.mulf %1, %9 : vector<1x2x128xf32>
    %c0_14 = arith.constant 0 : index
    %c1_15 = arith.constant 1 : index
    %11 = memref.load %arg3[%c0_14, %c1_15] : memref<8x4xf32, #tpu.memory_space<smem>>
    %12 = vector.broadcast %11 : f32 to vector<1x2x128xf32>
    %13 = arith.mulf %3, %12 : vector<1x2x128xf32>
    %14 = arith.addf %10, %13 : vector<1x2x128xf32>
    %c0_16 = arith.constant 0 : index
    %c2_17 = arith.constant 2 : index
    %15 = memref.load %arg3[%c0_16, %c2_17] : memref<8x4xf32, #tpu.memory_space<smem>>
    %16 = vector.broadcast %15 : f32 to vector<1x2x128xf32>
    %17 = arith.mulf %5, %16 : vector<1x2x128xf32>
    %18 = arith.addf %14, %17 : vector<1x2x128xf32>
    %c0_18 = arith.constant 0 : index
    %c3_19 = arith.constant 3 : index
    %19 = memref.load %arg3[%c0_18, %c3_19] : memref<8x4xf32, #tpu.memory_space<smem>>
    %20 = vector.broadcast %19 : f32 to vector<1x2x128xf32>
    %21 = arith.mulf %7, %20 : vector<1x2x128xf32>
    %22 = arith.addf %18, %21 : vector<1x2x128xf32>
    %c0_20 = arith.constant 0 : index
    %23 = memref.load %arg4[%c0_20] : memref<8xf32, #tpu.memory_space<smem>>
    %24 = vector.broadcast %23 : f32 to vector<1x2x128xf32>
    %25 = arith.addf %22, %24 : vector<1x2x128xf32>
    %cst = arith.constant 0.000000e+00 : f32
    %26 = vector.broadcast %cst : f32 to vector<1x2x128xf32>
    %27 = arith.maximumf %25, %26 : vector<1x2x128xf32>
    %c0_21 = arith.constant 0 : index
    %c0_22 = arith.constant 0 : index
    %c0_23 = arith.constant 0 : index
    %c0_24 = arith.constant 0 : index
    %28 = vector.load %arg5[%c0_21, %c0_22, %c0_23, %c0_24] : memref<1x8x2x128xf32, #tpu.memory_space<vmem>>, vector<1x1x2x128xf32>
    %29 = vector.shape_cast %28 : vector<1x1x2x128xf32> to vector<1x2x128xf32>
    %30 = vector.shape_cast %27 : vector<1x2x128xf32> to vector<1x1x2x128xf32>
    tpu.vector_store %arg5[%c0_21, %c0_22, %c0_23, %c0_24], %30 {strides = array<i32>} : memref<1x8x2x128xf32, #tpu.memory_space<vmem>>, vector<1x1x2x128xf32>,
    %c1_25 = arith.constant 1 : index
    %c0_26 = arith.constant 0 : index
    %31 = memref.load %arg3[%c1_25, %c0_26] : memref<8x4xf32, #tpu.memory_space<smem>>
    %32 = vector.broadcast %31 : f32 to vector<1x2x128xf32>
    %33 = arith.mulf %1, %32 : vector<1x2x128xf32>
    %c1_27 = arith.constant 1 : index
    %c1_28 = arith.constant 1 : index
    %34 = memref.load %arg3[%c1_27, %c1_28] : memref<8x4xf32, #tpu.memory_space<smem>>
    %35 = vector.broadcast %34 : f32 to vector<1x2x128xf32>
    %36 = arith.mulf %3, %35 : vector<1x2x128xf32>
    %37 = arith.addf %33, %36 : vector<1x2x128xf32>
    %c1_29 = arith.constant 1 : index
    %c2_30 = arith.constant 2 : index
    %38 = memref.load %arg3[%c1_29, %c2_30] : memref<8x4xf32, #tpu.memory_space<smem>>
    %39 = vector.broadcast %38 : f32 to vector<1x2x128xf32>
    %40 = arith.mulf %5, %39 : vector<1x2x128xf32>
    %41 = arith.addf %37, %40 : vector<1x2x128xf32>
    %c1_31 = arith.constant 1 : index
    %c3_32 = arith.constant 3 : index
    %42 = memref.load %arg3[%c1_31, %c3_32] : memref<8x4xf32, #tpu.memory_space<smem>>
    %43 = vector.broadcast %42 : f32 to vector<1x2x128xf32>
    %44 = arith.mulf %7, %43 : vector<1x2x128xf32>
    %45 = arith.addf %41, %44 : vector<1x2x128xf32>
    %c1_33 = arith.constant 1 : index
    %46 = memref.load %arg4[%c1_33] : memref<8xf32, #tpu.memory_space<smem>>
    %47 = vector.broadcast %46 : f32 to vector<1x2x128xf32>
    %48 = arith.addf %45, %47 : vector<1x2x128xf32>
    %cst_34 = arith.constant 0.000000e+00 : f32
    %49 = vector.broadcast %cst_34 : f32 to vector<1x2x128xf32>
    %50 = arith.maximumf %48, %49 : vector<1x2x128xf32>
    %c0_35 = arith.constant 0 : index
    %c1_36 = arith.constant 1 : index
    %c0_37 = arith.constant 0 : index
    %c0_38 = arith.constant 0 : index
    %51 = vector.load %arg5[%c0_35, %c1_36, %c0_37, %c0_38] : memref<1x8x2x128xf32, #tpu.memory_space<vmem>>, vector<1x1x2x128xf32>
    %52 = vector.shape_cast %51 : vector<1x1x2x128xf32> to vector<1x2x128xf32>
    %53 = vector.shape_cast %50 : vector<1x2x128xf32> to vector<1x1x2x128xf32>
    tpu.vector_store %arg5[%c0_35, %c1_36, %c0_37, %c0_38], %53 {strides = array<i32>} : memref<1x8x2x128xf32, #tpu.memory_space<vmem>>, vector<1x1x2x128xf32>,
    %c2_39 = arith.constant 2 : index
    %c0_40 = arith.constant 0 : index
    %54 = memref.load %arg3[%c2_39, %c0_40] : memref<8x4xf32, #tpu.memory_space<smem>>
    %55 = vector.broadcast %54 : f32 to vector<1x2x128xf32>
    %56 = arith.mulf %1, %55 : vector<1x2x128xf32>
    %c2_41 = arith.constant 2 : index
    %c1_42 = arith.constant 1 : index
    %57 = memref.load %arg3[%c2_41, %c1_42] : memref<8x4xf32, #tpu.memory_space<smem>>
    %58 = vector.broadcast %57 : f32 to vector<1x2x128xf32>
    %59 = arith.mulf %3, %58 : vector<1x2x128xf32>
    %60 = arith.addf %56, %59 : vector<1x2x128xf32>
    %c2_43 = arith.constant 2 : index
    %c2_44 = arith.constant 2 : index
    %61 = memref.load %arg3[%c2_43, %c2_44] : memref<8x4xf32, #tpu.memory_space<smem>>
    %62 = vector.broadcast %61 : f32 to vector<1x2x128xf32>
    %63 = arith.mulf %5, %62 : vector<1x2x128xf32>
    %64 = arith.addf %60, %63 : vector<1x2x128xf32>
    %c2_45 = arith.constant 2 : index
    %c3_46 = arith.constant 3 : index
    %65 = memref.load %arg3[%c2_45, %c3_46] : memref<8x4xf32, #tpu.memory_space<smem>>
    %66 = vector.broadcast %65 : f32 to vector<1x2x128xf32>
    %67 = arith.mulf %7, %66 : vector<1x2x128xf32>
    %68 = arith.addf %64, %67 : vector<1x2x128xf32>
    %c2_47 = arith.constant 2 : index
    %69 = memref.load %arg4[%c2_47] : memref<8xf32, #tpu.memory_space<smem>>
    %70 = vector.broadcast %69 : f32 to vector<1x2x128xf32>
    %71 = arith.addf %68, %70 : vector<1x2x128xf32>
    %cst_48 = arith.constant 0.000000e+00 : f32
    %72 = vector.broadcast %cst_48 : f32 to vector<1x2x128xf32>
    %73 = arith.maximumf %71, %72 : vector<1x2x128xf32>
    %c0_49 = arith.constant 0 : index
    %c2_50 = arith.constant 2 : index
    %c0_51 = arith.constant 0 : index
    %c0_52 = arith.constant 0 : index
    %74 = vector.load %arg5[%c0_49, %c2_50, %c0_51, %c0_52] : memref<1x8x2x128xf32, #tpu.memory_space<vmem>>, vector<1x1x2x128xf32>
    %75 = vector.shape_cast %74 : vector<1x1x2x128xf32> to vector<1x2x128xf32>
    %76 = vector.shape_cast %73 : vector<1x2x128xf32> to vector<1x1x2x128xf32>
    tpu.vector_store %arg5[%c0_49, %c2_50, %c0_51, %c0_52], %76 {strides = array<i32>} : memref<1x8x2x128xf32, #tpu.memory_space<vmem>>, vector<1x1x2x128xf32>,
    %c3_53 = arith.constant 3 : index
    %c0_54 = arith.constant 0 : index
    %77 = memref.load %arg3[%c3_53, %c0_54] : memref<8x4xf32, #tpu.memory_space<smem>>
    %78 = vector.broadcast %77 : f32 to vector<1x2x128xf32>
    %79 = arith.mulf %1, %78 : vector<1x2x128xf32>
    %c3_55 = arith.constant 3 : index
    %c1_56 = arith.constant 1 : index
    %80 = memref.load %arg3[%c3_55, %c1_56] : memref<8x4xf32, #tpu.memory_space<smem>>
    %81 = vector.broadcast %80 : f32 to vector<1x2x128xf32>
    %82 = arith.mulf %3, %81 : vector<1x2x128xf32>
    %83 = arith.addf %79, %82 : vector<1x2x128xf32>
    %c3_57 = arith.constant 3 : index
    %c2_58 = arith.constant 2 : index
    %84 = memref.load %arg3[%c3_57, %c2_58] : memref<8x4xf32, #tpu.memory_space<smem>>
    %85 = vector.broadcast %84 : f32 to vector<1x2x128xf32>
    %86 = arith.mulf %5, %85 : vector<1x2x128xf32>
    %87 = arith.addf %83, %86 : vector<1x2x128xf32>
    %c3_59 = arith.constant 3 : index
    %c3_60 = arith.constant 3 : index
    %88 = memref.load %arg3[%c3_59, %c3_60] : memref<8x4xf32, #tpu.memory_space<smem>>
    %89 = vector.broadcast %88 : f32 to vector<1x2x128xf32>
    %90 = arith.mulf %7, %89 : vector<1x2x128xf32>
    %91 = arith.addf %87, %90 : vector<1x2x128xf32>
    %c3_61 = arith.constant 3 : index
    %92 = memref.load %arg4[%c3_61] : memref<8xf32, #tpu.memory_space<smem>>
    %93 = vector.broadcast %92 : f32 to vector<1x2x128xf32>
    %94 = arith.addf %91, %93 : vector<1x2x128xf32>
    %cst_62 = arith.constant 0.000000e+00 : f32
    %95 = vector.broadcast %cst_62 : f32 to vector<1x2x128xf32>
    %96 = arith.maximumf %94, %95 : vector<1x2x128xf32>
    %c0_63 = arith.constant 0 : index
    %c3_64 = arith.constant 3 : index
    %c0_65 = arith.constant 0 : index
    %c0_66 = arith.constant 0 : index
    %97 = vector.load %arg5[%c0_63, %c3_64, %c0_65, %c0_66] : memref<1x8x2x128xf32, #tpu.memory_space<vmem>>, vector<1x1x2x128xf32>
    %98 = vector.shape_cast %97 : vector<1x1x2x128xf32> to vector<1x2x128xf32>
    %99 = vector.shape_cast %96 : vector<1x2x128xf32> to vector<1x1x2x128xf32>
    tpu.vector_store %arg5[%c0_63, %c3_64, %c0_65, %c0_66], %99 {strides = array<i32>} : memref<1x8x2x128xf32, #tpu.memory_space<vmem>>, vector<1x1x2x128xf32>,
    %c4 = arith.constant 4 : index
    %c0_67 = arith.constant 0 : index
    %100 = memref.load %arg3[%c4, %c0_67] : memref<8x4xf32, #tpu.memory_space<smem>>
    %101 = vector.broadcast %100 : f32 to vector<1x2x128xf32>
    %102 = arith.mulf %1, %101 : vector<1x2x128xf32>
    %c4_68 = arith.constant 4 : index
    %c1_69 = arith.constant 1 : index
    %103 = memref.load %arg3[%c4_68, %c1_69] : memref<8x4xf32, #tpu.memory_space<smem>>
    %104 = vector.broadcast %103 : f32 to vector<1x2x128xf32>
    %105 = arith.mulf %3, %104 : vector<1x2x128xf32>
    %106 = arith.addf %102, %105 : vector<1x2x128xf32>
    %c4_70 = arith.constant 4 : index
    %c2_71 = arith.constant 2 : index
    %107 = memref.load %arg3[%c4_70, %c2_71] : memref<8x4xf32, #tpu.memory_space<smem>>
    %108 = vector.broadcast %107 : f32 to vector<1x2x128xf32>
    %109 = arith.mulf %5, %108 : vector<1x2x128xf32>
    %110 = arith.addf %106, %109 : vector<1x2x128xf32>
    %c4_72 = arith.constant 4 : index
    %c3_73 = arith.constant 3 : index
    %111 = memref.load %arg3[%c4_72, %c3_73] : memref<8x4xf32, #tpu.memory_space<smem>>
    %112 = vector.broadcast %111 : f32 to vector<1x2x128xf32>
    %113 = arith.mulf %7, %112 : vector<1x2x128xf32>
    %114 = arith.addf %110, %113 : vector<1x2x128xf32>
    %c4_74 = arith.constant 4 : index
    %115 = memref.load %arg4[%c4_74] : memref<8xf32, #tpu.memory_space<smem>>
    %116 = vector.broadcast %115 : f32 to vector<1x2x128xf32>
    %117 = arith.addf %114, %116 : vector<1x2x128xf32>
    %cst_75 = arith.constant 0.000000e+00 : f32
    %118 = vector.broadcast %cst_75 : f32 to vector<1x2x128xf32>
    %119 = arith.maximumf %117, %118 : vector<1x2x128xf32>
    %c0_76 = arith.constant 0 : index
    %c4_77 = arith.constant 4 : index
    %c0_78 = arith.constant 0 : index
    %c0_79 = arith.constant 0 : index
    %120 = vector.load %arg5[%c0_76, %c4_77, %c0_78, %c0_79] : memref<1x8x2x128xf32, #tpu.memory_space<vmem>>, vector<1x1x2x128xf32>
    %121 = vector.shape_cast %120 : vector<1x1x2x128xf32> to vector<1x2x128xf32>
    %122 = vector.shape_cast %119 : vector<1x2x128xf32> to vector<1x1x2x128xf32>
    tpu.vector_store %arg5[%c0_76, %c4_77, %c0_78, %c0_79], %122 {strides = array<i32>} : memref<1x8x2x128xf32, #tpu.memory_space<vmem>>, vector<1x1x2x128xf32>,
    %c5 = arith.constant 5 : index
    %c0_80 = arith.constant 0 : index
    %123 = memref.load %arg3[%c5, %c0_80] : memref<8x4xf32, #tpu.memory_space<smem>>
    %124 = vector.broadcast %123 : f32 to vector<1x2x128xf32>
    %125 = arith.mulf %1, %124 : vector<1x2x128xf32>
    %c5_81 = arith.constant 5 : index
    %c1_82 = arith.constant 1 : index
    %126 = memref.load %arg3[%c5_81, %c1_82] : memref<8x4xf32, #tpu.memory_space<smem>>
    %127 = vector.broadcast %126 : f32 to vector<1x2x128xf32>
    %128 = arith.mulf %3, %127 : vector<1x2x128xf32>
    %129 = arith.addf %125, %128 : vector<1x2x128xf32>
    %c5_83 = arith.constant 5 : index
    %c2_84 = arith.constant 2 : index
    %130 = memref.load %arg3[%c5_83, %c2_84] : memref<8x4xf32, #tpu.memory_space<smem>>
    %131 = vector.broadcast %130 : f32 to vector<1x2x128xf32>
    %132 = arith.mulf %5, %131 : vector<1x2x128xf32>
    %133 = arith.addf %129, %132 : vector<1x2x128xf32>
    %c5_85 = arith.constant 5 : index
    %c3_86 = arith.constant 3 : index
    %134 = memref.load %arg3[%c5_85, %c3_86] : memref<8x4xf32, #tpu.memory_space<smem>>
    %135 = vector.broadcast %134 : f32 to vector<1x2x128xf32>
    %136 = arith.mulf %7, %135 : vector<1x2x128xf32>
    %137 = arith.addf %133, %136 : vector<1x2x128xf32>
    %c5_87 = arith.constant 5 : index
    %138 = memref.load %arg4[%c5_87] : memref<8xf32, #tpu.memory_space<smem>>
    %139 = vector.broadcast %138 : f32 to vector<1x2x128xf32>
    %140 = arith.addf %137, %139 : vector<1x2x128xf32>
    %cst_88 = arith.constant 0.000000e+00 : f32
    %141 = vector.broadcast %cst_88 : f32 to vector<1x2x128xf32>
    %142 = arith.maximumf %140, %141 : vector<1x2x128xf32>
    %c0_89 = arith.constant 0 : index
    %c5_90 = arith.constant 5 : index
    %c0_91 = arith.constant 0 : index
    %c0_92 = arith.constant 0 : index
    %143 = vector.load %arg5[%c0_89, %c5_90, %c0_91, %c0_92] : memref<1x8x2x128xf32, #tpu.memory_space<vmem>>, vector<1x1x2x128xf32>
    %144 = vector.shape_cast %143 : vector<1x1x2x128xf32> to vector<1x2x128xf32>
    %145 = vector.shape_cast %142 : vector<1x2x128xf32> to vector<1x1x2x128xf32>
    tpu.vector_store %arg5[%c0_89, %c5_90, %c0_91, %c0_92], %145 {strides = array<i32>} : memref<1x8x2x128xf32, #tpu.memory_space<vmem>>, vector<1x1x2x128xf32>,
    %c6 = arith.constant 6 : index
    %c0_93 = arith.constant 0 : index
    %146 = memref.load %arg3[%c6, %c0_93] : memref<8x4xf32, #tpu.memory_space<smem>>
    %147 = vector.broadcast %146 : f32 to vector<1x2x128xf32>
    %148 = arith.mulf %1, %147 : vector<1x2x128xf32>
    %c6_94 = arith.constant 6 : index
    %c1_95 = arith.constant 1 : index
    %149 = memref.load %arg3[%c6_94, %c1_95] : memref<8x4xf32, #tpu.memory_space<smem>>
    %150 = vector.broadcast %149 : f32 to vector<1x2x128xf32>
    %151 = arith.mulf %3, %150 : vector<1x2x128xf32>
    %152 = arith.addf %148, %151 : vector<1x2x128xf32>
    %c6_96 = arith.constant 6 : index
    %c2_97 = arith.constant 2 : index
    %153 = memref.load %arg3[%c6_96, %c2_97] : memref<8x4xf32, #tpu.memory_space<smem>>
    %154 = vector.broadcast %153 : f32 to vector<1x2x128xf32>
    %155 = arith.mulf %5, %154 : vector<1x2x128xf32>
    %156 = arith.addf %152, %155 : vector<1x2x128xf32>
    %c6_98 = arith.constant 6 : index
    %c3_99 = arith.constant 3 : index
    %157 = memref.load %arg3[%c6_98, %c3_99] : memref<8x4xf32, #tpu.memory_space<smem>>
    %158 = vector.broadcast %157 : f32 to vector<1x2x128xf32>
    %159 = arith.mulf %7, %158 : vector<1x2x128xf32>
    %160 = arith.addf %156, %159 : vector<1x2x128xf32>
    %c6_100 = arith.constant 6 : index
    %161 = memref.load %arg4[%c6_100] : memref<8xf32, #tpu.memory_space<smem>>
    %162 = vector.broadcast %161 : f32 to vector<1x2x128xf32>
    %163 = arith.addf %160, %162 : vector<1x2x128xf32>
    %cst_101 = arith.constant 0.000000e+00 : f32
    %164 = vector.broadcast %cst_101 : f32 to vector<1x2x128xf32>
    %165 = arith.maximumf %163, %164 : vector<1x2x128xf32>
    %c0_102 = arith.constant 0 : index
    %c6_103 = arith.constant 6 : index
    %c0_104 = arith.constant 0 : index
    %c0_105 = arith.constant 0 : index
    %166 = vector.load %arg5[%c0_102, %c6_103, %c0_104, %c0_105] : memref<1x8x2x128xf32, #tpu.memory_space<vmem>>, vector<1x1x2x128xf32>
    %167 = vector.shape_cast %166 : vector<1x1x2x128xf32> to vector<1x2x128xf32>
    %168 = vector.shape_cast %165 : vector<1x2x128xf32> to vector<1x1x2x128xf32>
    tpu.vector_store %arg5[%c0_102, %c6_103, %c0_104, %c0_105], %168 {strides = array<i32>} : memref<1x8x2x128xf32, #tpu.memory_space<vmem>>, vector<1x1x2x128xf32>,
    %c7 = arith.constant 7 : index
    %c0_106 = arith.constant 0 : index
    %169 = memref.load %arg3[%c7, %c0_106] : memref<8x4xf32, #tpu.memory_space<smem>>
    %170 = vector.broadcast %169 : f32 to vector<1x2x128xf32>
    %171 = arith.mulf %1, %170 : vector<1x2x128xf32>
    %c7_107 = arith.constant 7 : index
    %c1_108 = arith.constant 1 : index
    %172 = memref.load %arg3[%c7_107, %c1_108] : memref<8x4xf32, #tpu.memory_space<smem>>
    %173 = vector.broadcast %172 : f32 to vector<1x2x128xf32>
    %174 = arith.mulf %3, %173 : vector<1x2x128xf32>
    %175 = arith.addf %171, %174 : vector<1x2x128xf32>
    %c7_109 = arith.constant 7 : index
    %c2_110 = arith.constant 2 : index
    %176 = memref.load %arg3[%c7_109, %c2_110] : memref<8x4xf32, #tpu.memory_space<smem>>
    %177 = vector.broadcast %176 : f32 to vector<1x2x128xf32>
    %178 = arith.mulf %5, %177 : vector<1x2x128xf32>
    %179 = arith.addf %175, %178 : vector<1x2x128xf32>
    %c7_111 = arith.constant 7 : index
    %c3_112 = arith.constant 3 : index
    %180 = memref.load %arg3[%c7_111, %c3_112] : memref<8x4xf32, #tpu.memory_space<smem>>
    %181 = vector.broadcast %180 : f32 to vector<1x2x128xf32>
    %182 = arith.mulf %7, %181 : vector<1x2x128xf32>
    %183 = arith.addf %179, %182 : vector<1x2x128xf32>
    %c7_113 = arith.constant 7 : index
    %184 = memref.load %arg4[%c7_113] : memref<8xf32, #tpu.memory_space<smem>>
    %185 = vector.broadcast %184 : f32 to vector<1x2x128xf32>
    %186 = arith.addf %183, %185 : vector<1x2x128xf32>
    %cst_114 = arith.constant 0.000000e+00 : f32
    %187 = vector.broadcast %cst_114 : f32 to vector<1x2x128xf32>
    %188 = arith.maximumf %186, %187 : vector<1x2x128xf32>
    %c0_115 = arith.constant 0 : index
    %c7_116 = arith.constant 7 : index
    %c0_117 = arith.constant 0 : index
    %c0_118 = arith.constant 0 : index
    %189 = vector.load %arg5[%c0_115, %c7_116, %c0_117, %c0_118] : memref<1x8x2x128xf32, #tpu.memory_space<vmem>>, vector<1x1x2x128xf32>
    %190 = vector.shape_cast %189 : vector<1x1x2x128xf32> to vector<1x2x128xf32>
    %191 = vector.shape_cast %188 : vector<1x2x128xf32> to vector<1x1x2x128xf32>
    tpu.vector_store %arg5[%c0_115, %c7_116, %c0_117, %c0_118], %191 {strides = array<i32>} : memref<1x8x2x128xf32, #tpu.memory_space<vmem>>, vector<1x1x2x128xf32>,
    return
  }
  func.func @transform_0(%arg0: i32, %arg1: i32) -> (i32, i32, i32, i32) {
    %c0_i32 = arith.constant 0 : i32
    %c0_i32_0 = arith.constant 0 : i32
    %c0_i32_1 = arith.constant 0 : i32
    return %arg0, %c0_i32, %arg1, %c0_i32_0 : i32, i32, i32, i32
  }
  func.func @transform_1(%arg0: i32, %arg1: i32) -> (i32, i32) {
    %c0_i32 = arith.constant 0 : i32
    %c0_i32_0 = arith.constant 0 : i32
    %c0_i32_1 = arith.constant 0 : i32
    return %c0_i32, %c0_i32_0 : i32, i32
  }
  func.func @transform_2(%arg0: i32, %arg1: i32) -> i32 {
    %c0_i32 = arith.constant 0 : i32
    %c0_i32_0 = arith.constant 0 : i32
    return %c0_i32 : i32
  }
  func.func @transform_3(%arg0: i32, %arg1: i32) -> (i32, i32, i32, i32) {
    %c0_i32 = arith.constant 0 : i32
    %c0_i32_0 = arith.constant 0 : i32
    %c0_i32_1 = arith.constant 0 : i32
    return %arg0, %c0_i32, %arg1, %c0_i32_0 : i32, i32, i32, i32
  }
}

</mosaic_0001>

<llo_original>
// kernel: tpu_custom_call.1
$region0: #{tpu_custom_call.1}
  #allocation0 [shape = 'u32[]', space=smem, size = 0x4, offset = 0x4, fixed_abs, tag = 'smem constant byte address 0x4 - core index']
  #allocation1 [shape = 'u32[144,128]{1,0:T(1,128)}', space=vmem, size = 0x12000, scoped, tag = 'internal scratch']
  %s0 = inlined_call_operand.hbm [shape: f32[2,4,2,128], index: 0, kind: input, shape index: {}]
  %s1 = inlined_call_operand.vmem [shape: f32[8,4], index: 1, kind: input, shape index: {}]
  %s2 = inlined_call_operand.vmem [shape: f32[8], index: 2, kind: input, shape index: {}]
  %s3 = inlined_call_operand.hbm [shape: f32[2,8,2,128], index: 3, kind: output, shape index: {}]
  %s4 = sld [smem:[#allocation0]]
  $region57: #{tpu_custom_call.1} parent=0
    _
  %s6 = ssub.s32 1, %s4
  %s7 = scalar_select 0, %s6, %s4
  $region1: #{tpu_custom_call.1} parent=0
    #allocation2 [shape = 'u8[8192]{0}', space=vmem, size = 0x2000, scoped, tag = 'input window, operand 0']
    #allocation3 [shape = 's32[2]{0}', space=sflag, size = 0x8, scoped, tag = 'scoped memory for tpu_custom_call.1']
    #allocation4 [shape = 's32[2]{0}', space=sflag, size = 0x8, scoped, tag = 'scoped memory for tpu_custom_call.1']
    #allocation5 [shape = 's32[2]{0}', space=sflag, size = 0x8, scoped, tag = 'scoped memory for tpu_custom_call.1']
    #allocation6 [shape = 'u8[4096]{0}', space=smem, size = 0x1000, scoped, tag = 'input window, operand 1, single buffered']
    #allocation7 [shape = 'u8[512]{0}', space=smem, size = 0x200, scoped, tag = 'input window, operand 2, single buffered']
    #allocation8 [shape = 's32[1]{0}', space=sflag, size = 0x4, scoped, tag = 'scoped memory for tpu_custom_call.1']
    #allocation9 [shape = 'u8[16384]{0}', space=vmem, size = 0x4000, scoped, tag = 'output window, operand 0']
    %8 = vsyncpa [#allocation3], 0
    %s9 = scalar_lea.sflag [#allocation3], 1
    %10 = vsyncpa %s9, 0
    %11 = vsyncpa [#allocation5], 0
    %12 = vsyncpa [#allocation8], 0
    %13 = vsyncpa [#allocation4], 0
    %s14 = scalar_lea.sflag [#allocation4], 1
    %15 = vsyncpa %s14, 0
    loop: start=0, step=1, limit=4
    $region2: #{tpu_custom_call.1} parent=1 // loop_pre_header
      _
    $region3: #{tpu_custom_call.1} parent=1 // loop_header
      %s17 = sphi 0, %s21
      %p18 = scmp.ge.s32.totalorder %s17, 4
      %s24 = sphi 0, %s36
      %s25 = sphi 0, %s32
      %s26 = sphi 0, %s24
      %s27 = sphi 0, %s25
      %s28 = sphi 0, %s26
      %s29 = sphi 0, %s27
      %s41 = sphi 0, %s43
      %s44 = sphi 0, %s41
      %s45 = sphi 0, %s44
      %s61 = sphi 0, %s45
      %s65 = sphi 0, %s65
      %s67 = sphi 0, %s65
      %s68 = sphi 0, %s67
      %s82 = sphi 0, %s68
      %s86 = sphi 0, %s86
      %s88 = sphi 0, %s86
      %s89 = sphi 0, %s88
      %s103 = sphi 0, %s89
      %s111 = sphi 0, %s113
      %s114 = sphi 0, %s111
      %s115 = sphi 0, %s114
      %s131 = sphi 0, %s115
    $region4: #{tpu_custom_call.1} parent=1 // loop_header_branch
      %20 = sbr.rel (%p18) target = $region8
    $region5: #{tpu_custom_call.1} parent=1 // loop_body
      %s22 = ssub.s32 %s17, 1
      %s23 = ssub.s32 %s17, 2
      %s30 = sadd.s32 1, %s25
      %p31 = scmp.ge.s32.totalorder %s30, 1
      %s32 = scalar_select %p31, 0, %s30
      %s33 = sadd.s32 1, %s24
      %s34 = scalar_select %p31, %s33, %s24
      %p35 = scmp.ge.s32.totalorder %s34, 2
      %s36 = scalar_select %p35, 0, %s34
      %s37 = ssub.s32 %s24, %s36
      %s38 = ssub.s32 %s25, %s32
      %s39 = sor.u32 %s37, %s38
      %p40 = scmp.eq.s32.totalorder %s39, 0
      %s42 = sadd.s32 %s41, 1
      %s43 = scalar_select %p40, %s41, %s42
      %p46 = pneg %p40
      %p47 = scmp.eq.s32.totalorder %s17, 1
      %p48 = por %p46, %p47
      %p49 = scmp.ne.s32.totalorder %s41, %s44
      %p50 = scmp.eq.s32.totalorder %s17, 0
      %p51 = por %p49, %p50
      %p52 = scmp.ne.s32.totalorder %s41, %s44
      %p53 = scmp.eq.s32.totalorder %s22, 1
      %p54 = por %p52, %p53
      %p55 = scmp.ne.s32.totalorder %s44, %s45
      %p56 = scmp.eq.s32.totalorder %s22, 0
      %p57 = por %p55, %p56
      %p58 = scmp.ne.s32.totalorder %s44, %s45
      %p59 = scmp.eq.s32.totalorder %s23, 1
      %p60 = por %p58, %p59
      %p62 = scmp.ne.s32.totalorder %s45, %s61
      %p63 = scmp.eq.s32.totalorder %s23, 0
      %p64 = por %p62, %p63
      %s66 = sadd.s32 %s65, 1
      %p69 = scmp.eq.s32.totalorder %s17, 1
      %p70 = scmp.ne.s32.totalorder %s65, %s67
      %p71 = scmp.eq.s32.totalorder %s17, 0
      %p72 = por %p70, %p71
      %p73 = scmp.ne.s32.totalorder %s65, %s67
      %p74 = scmp.eq.s32.totalorder %s22, 1
      %p75 = por %p73, %p74
      %p76 = scmp.ne.s32.totalorder %s67, %s68
      %p77 = scmp.eq.s32.totalorder %s22, 0
      %p78 = por %p76, %p77
      %p79 = scmp.ne.s32.totalorder %s67, %s68
      %p80 = scmp.eq.s32.totalorder %s23, 1
      %p81 = por %p79, %p80
      %p83 = scmp.ne.s32.totalorder %s68, %s82
      %p84 = scmp.eq.s32.totalorder %s23, 0
      %p85 = por %p83, %p84
      %s87 = sadd.s32 %s86, 1
      %p90 = scmp.eq.s32.totalorder %s17, 1
      %p91 = scmp.ne.s32.totalorder %s86, %s88
      %p92 = scmp.eq.s32.totalorder %s17, 0
      %p93 = por %p91, %p92
      %p94 = scmp.ne.s32.totalorder %s86, %s88
      %p95 = scmp.eq.s32.totalorder %s22, 1
      %p96 = por %p94, %p95
      %p97 = scmp.ne.s32.totalorder %s88, %s89
      %p98 = scmp.eq.s32.totalorder %s22, 0
      %p99 = por %p97, %p98
      %p100 = scmp.ne.s32.totalorder %s88, %s89
      %p101 = scmp.eq.s32.totalorder %s23, 1
      %p102 = por %p100, %p101
      %p104 = scmp.ne.s32.totalorder %s89, %s103
      %p105 = scmp.eq.s32.totalorder %s23, 0
      %p106 = por %p104, %p105
      %s107 = ssub.s32 %s24, %s36
      %s108 = ssub.s32 %s25, %s32
      %s109 = sor.u32 %s107, %s108
      %p110 = scmp.eq.s32.totalorder %s109, 0
      %s112 = sadd.s32 %s111, 1
      %s113 = scalar_select %p110, %s111, %s112
      %p116 = pneg %p110
      %p117 = scmp.eq.s32.totalorder %s17, 1
      %p118 = por %p116, %p117
      %p119 = scmp.ne.s32.totalorder %s111, %s114
      %p120 = scmp.eq.s32.totalorder %s17, 0
      %p121 = por %p119, %p120
      %p122 = scmp.ne.s32.totalorder %s111, %s114
      %p123 = scmp.eq.s32.totalorder %s22, 1
      %p124 = por %p122, %p123
      %p125 = scmp.ne.s32.totalorder %s114, %s115
      %p126 = scmp.eq.s32.totalorder %s22, 0
      %p127 = por %p125, %p126
      %p128 = scmp.ne.s32.totalorder %s114, %s115
      %p129 = scmp.eq.s32.totalorder %s23, 1
      %p130 = por %p128, %p129
      %p132 = scmp.ne.s32.totalorder %s115, %s131
      %p133 = scmp.eq.s32.totalorder %s23, 0
      %p134 = por %p132, %p133
      %p135 = scmp.le.s32.totalorder 1, %s17
      %p136 = scmp.lt.s32.totalorder %s17, 3
      %p137 = pnand %p135, %p136
      %p138 = pneg %p137
      // Predicated region
      $region9: #{tpu_custom_call.1} parent=5 // pred_check
        _
      $region10: #{tpu_custom_call.1} parent=5 // pred_check_branch
        %140 = sbr.rel (%p137) target = $region12
      $region11: #{tpu_custom_call.1} parent=5 // pred_region
        %s141 = ssub.s32 %s17, 1
        // Predicated region
        $region13: #{tpu_custom_call.1} parent=11 // pred_check
          %p142 = pneg %p78
        $region14: #{tpu_custom_call.1} parent=11 // pred_check_branch
          %144 = sbr.rel (%p142) target = $region16
        $region15: #{tpu_custom_call.1} parent=11 // pred_region
          %s146 = ssub.s32 128, 128
          %147 = vsyncadd [#allocation5], %s146
          %s149 = sshll.u32 %s1, 4
          %s150 = int_to_ptr.vmem [resolvable:$true] %s149
          %152 = dma.vmem_to_smem %s150, 128, [#allocation6], [#allocation5]
        $region16: #{tpu_custom_call.1} parent=11 // pred_fallthru
          _
        // Predicated region
        $region17: #{tpu_custom_call.1} parent=11 // pred_check
          %p153 = pneg %p99
        $region18: #{tpu_custom_call.1} parent=11 // pred_check_branch
          %155 = sbr.rel (%p153) target = $region20
        $region19: #{tpu_custom_call.1} parent=11 // pred_region
          %s157 = ssub.s32 16, 16
          %158 = vsyncadd [#allocation8], %s157
          %s160 = sshll.u32 %s2, 4
          %s161 = int_to_ptr.vmem [resolvable:$true] %s160
          %163 = dma.vmem_to_smem %s161, 16, [#allocation7], [#allocation8]
        $region20: #{tpu_custom_call.1} parent=11 // pred_fallthru
          _
      $region12: #{tpu_custom_call.1} parent=5 // pred_fallthru
        _
      %p164 = scmp.lt.s32.totalorder %s17, 2
      // Predicated region
      $region21: #{tpu_custom_call.1} parent=5 // pred_check
        %p165 = pneg %p164
      $region22: #{tpu_custom_call.1} parent=5 // pred_check_branch
        %167 = sbr.rel (%p165) target = $region24
      $region23: #{tpu_custom_call.1} parent=5 // pred_region
        // Predicated region
        $region25: #{tpu_custom_call.1} parent=23 // pred_check
          %p168 = pneg %p51
        $region26: #{tpu_custom_call.1} parent=23 // pred_check_branch
          %170 = sbr.rel (%p168) target = $region28
        $region27: #{tpu_custom_call.1} parent=23 // pred_region
          %s171 = sand.u32 %s41, 1
          %s172 = scalar_lea.sflag [#allocation3], %s171
          %s173 = sand.u32 %s41, 1
          %s174 = smul.addr %s173, 8
          %s175 = scalar_lea.vmem [#allocation2], %s174
          %s177 = ssub.s32 128, 128
          %178 = vsyncadd %s172, %s177
          %s179 = smul.addr %s24, 4
          %s180 = sadd.s32 %s25, %s179
          %s181 = smul.addr %s180, 32
          %s182 = scalar_lea.hbm %s0, %s181
          %s183 = sshll.u32 %s175, 4
          %s184 = int_to_ptr.vmem [resolvable:$true] %s183
          %189 = dma.hbm_to_vmem [thread:$0]  %s182, 128, %s184, %s172, 32, 32, 2
        $region28: #{tpu_custom_call.1} parent=23 // pred_fallthru
          _
      $region24: #{tpu_custom_call.1} parent=5 // pred_fallthru
        _
      %p190 = scmp.le.s32.totalorder 1, %s17
      %p191 = scmp.lt.s32.totalorder %s17, 3
      %p192 = pnand %p190, %p191
      %p193 = pneg %p192
      // Predicated region
      $region29: #{tpu_custom_call.1} parent=5 // pred_check
        _
      $region30: #{tpu_custom_call.1} parent=5 // pred_check_branch
        %195 = sbr.rel (%p192) target = $region32
      $region31: #{tpu_custom_call.1} parent=5 // pred_region
        %s196 = ssub.s32 %s17, 1
        %s197 = sand.u32 %s44, 1
        %s198 = scalar_lea.sflag [#allocation3], %s197
        %s199 = sand.u32 %s44, 1
        %s200 = smul.addr %s199, 8
        %s201 = scalar_lea.vmem [#allocation2], %s200
        // Predicated region
        $region33: #{tpu_custom_call.1} parent=31 // pred_check
          %p202 = pneg %p57
        $region34: #{tpu_custom_call.1} parent=31 // pred_check_branch
          %204 = sbr.rel (%p202) target = $region36
        $region35: #{tpu_custom_call.1} parent=31 // pred_region
          %205 = dma.done %s198, 128
        $region36: #{tpu_custom_call.1} parent=31 // pred_fallthru
          _
        // Predicated region
        $region37: #{tpu_custom_call.1} parent=31 // pred_check
          %p206 = pneg %p78
        $region38: #{tpu_custom_call.1} parent=31 // pred_check_branch
          %208 = sbr.rel (%p206) target = $region40
        $region39: #{tpu_custom_call.1} parent=31 // pred_region
          %209 = dma.done [#allocation5], 128
        $region40: #{tpu_custom_call.1} parent=31 // pred_fallthru
          _
        // Predicated region
        $region41: #{tpu_custom_call.1} parent=31 // pred_check
          %p210 = pneg %p99
        $region42: #{tpu_custom_call.1} parent=31 // pred_check_branch
          %212 = sbr.rel (%p210) target = $region44
        $region43: #{tpu_custom_call.1} parent=31 // pred_region
          %213 = dma.done [#allocation8], 16
        $region44: #{tpu_custom_call.1} parent=31 // pred_fallthru
          _
        %214 = sfence
        %s215 = sand.u32 %s44, 1
        %s216 = scalar_lea.sflag [#allocation3], %s215
        %s217 = sand.u32 %s44, 1
        %s218 = smul.addr %s217, 8
        %s219 = scalar_lea.vmem [#allocation2], %s218
        %p220 = pneg %p57
        %p221 = pneg %p54
        %p222 = pneg %p78
        %p223 = pneg %p75
        %p224 = pneg %p99
        %p225 = pneg %p96
        %p226 = pneg %p127
        %p227 = pneg %p124
        %s228 = sand.u32 %s114, 1
        %s229 = scalar_lea.sflag [#allocation4], %s228
        %s230 = sand.u32 %s114, 1
        %s231 = smul.addr %s230, 16
        %s232 = scalar_lea.vmem [#allocation9], %s231
        %v233 = vld [vmem:[%s201] sm:$0x3]
        %s234 = scalar_lea.vmem %s201, 2 [#allocation2]
        %v235 = vld [vmem:[%s234] sm:$0x3]
        %s236 = scalar_lea.vmem %s201, 4 [#allocation2]
        %v237 = vld [vmem:[%s236] sm:$0x3]
        %s238 = scalar_lea.vmem %s201, 6 [#allocation2]
        %v239 = vld [vmem:[%s238] sm:$0x3]
        %s240 = sld [smem:[#allocation6]]
        %v241 = vstv %s240
        %v242 = vmul.f32 %v233, %v241
        %s243 = sld [smem:[#allocation6 + $0x1]]
        %v244 = vstv %s243
        %v245 = vmul.f32 %v235, %v244
        %v246 = vadd.f32 %v242, %v245
        %s247 = sld [smem:[#allocation6 + $0x2]]
        %v248 = vstv %s247
        %v249 = vmul.f32 %v237, %v248
        %v250 = vadd.f32 %v246, %v249
        %s251 = sld [smem:[#allocation6 + $0x3]]
        %v252 = vstv %s251
        %v253 = vmul.f32 %v239, %v252
        %v254 = vadd.f32 %v250, %v253
        %s255 = sld [smem:[#allocation7]]
        %v256 = vstv %s255
        %v257 = vadd.f32 %v254, %v256
        %v258 = vmax.f32 %v257, 0.0
        %259 = vst [vmem:[%s232] sm:$0x3] %v258
        %s260 = sld [smem:[#allocation6 + $0x80]]
        %v261 = vstv %s260
        %v262 = vmul.f32 %v233, %v261
        %s263 = sld [smem:[#allocation6 + $0x81]]
        %v264 = vstv %s263
        %v265 = vmul.f32 %v235, %v264
        %v266 = vadd.f32 %v262, %v265
        %s267 = sld [smem:[#allocation6 + $0x82]]
        %v268 = vstv %s267
        %v269 = vmul.f32 %v237, %v268
        %v270 = vadd.f32 %v266, %v269
        %s271 = sld [smem:[#allocation6 + $0x83]]
        %v272 = vstv %s271
        %v273 = vmul.f32 %v239, %v272
        %v274 = vadd.f32 %v270, %v273
        %s275 = sld [smem:[#allocation7 + $0x1]]
        %v276 = vstv %s275
        %v277 = vadd.f32 %v274, %v276
        %v278 = vmax.f32 %v277, 0.0
        %s279 = scalar_lea.vmem %s232, 2 [#allocation9]
        %280 = vst [vmem:[%s279] sm:$0x3] %v278
        %s281 = sld [smem:[#allocation6 + $0x100]]
        %v282 = vstv %s281
        %v283 = vmul.f32 %v233, %v282
        %s284 = sld [smem:[#allocation6 + $0x101]]
        %v285 = vstv %s284
        %v286 = vmul.f32 %v235, %v285
        %v287 = vadd.f32 %v283, %v286
        %s288 = sld [smem:[#allocation6 + $0x102]]
        %v289 = vstv %s288
        %v290 = vmul.f32 %v237, %v289
        %v291 = vadd.f32 %v287, %v290
        %s292 = sld [smem:[#allocation6 + $0x103]]
        %v293 = vstv %s292
        %v294 = vmul.f32 %v239, %v293
        %v295 = vadd.f32 %v291, %v294
        %s296 = sld [smem:[#allocation7 + $0x2]]
        %v297 = vstv %s296
        %v298 = vadd.f32 %v295, %v297
        %v299 = vmax.f32 %v298, 0.0
        %s300 = scalar_lea.vmem %s232, 4 [#allocation9]
        %301 = vst [vmem:[%s300] sm:$0x3] %v299
        %s302 = sld [smem:[#allocation6 + $0x180]]
        %v303 = vstv %s302
        %v304 = vmul.f32 %v233, %v303
        %s305 = sld [smem:[#allocation6 + $0x181]]
        %v306 = vstv %s305
        %v307 = vmul.f32 %v235, %v306
        %v308 = vadd.f32 %v304, %v307
        %s309 = sld [smem:[#allocation6 + $0x182]]
        %v310 = vstv %s309
        %v311 = vmul.f32 %v237, %v310
        %v312 = vadd.f32 %v308, %v311
        %s313 = sld [smem:[#allocation6 + $0x183]]
        %v314 = vstv %s313
        %v315 = vmul.f32 %v239, %v314
        %v316 = vadd.f32 %v312, %v315
        %s317 = sld [smem:[#allocation7 + $0x3]]
        %v318 = vstv %s317
        %v319 = vadd.f32 %v316, %v318
        %v320 = vmax.f32 %v319, 0.0
        %s321 = scalar_lea.vmem %s232, 6 [#allocation9]
        %322 = vst [vmem:[%s321] sm:$0x3] %v320
        %s323 = sld [smem:[#allocation6 + $0x200]]
        %v324 = vstv %s323
        %v325 = vmul.f32 %v233, %v324
        %s326 = sld [smem:[#allocation6 + $0x201]]
        %v327 = vstv %s326
        %v328 = vmul.f32 %v235, %v327
        %v329 = vadd.f32 %v325, %v328
        %s330 = sld [smem:[#allocation6 + $0x202]]
        %v331 = vstv %s330
        %v332 = vmul.f32 %v237, %v331
        %v333 = vadd.f32 %v329, %v332
        %s334 = sld [smem:[#allocation6 + $0x203]]
        %v335 = vstv %s334
        %v336 = vmul.f32 %v239, %v335
        %v337 = vadd.f32 %v333, %v336
        %s338 = sld [smem:[#allocation7 + $0x4]]
        %v339 = vstv %s338
        %v340 = vadd.f32 %v337, %v339
        %v341 = vmax.f32 %v340, 0.0
        %s342 = scalar_lea.vmem %s232, 8 [#allocation9]
        %343 = vst [vmem:[%s342] sm:$0x3] %v341
        %s344 = sld [smem:[#allocation6 + $0x280]]
        %v345 = vstv %s344
        %v346 = vmul.f32 %v233, %v345
        %s347 = sld [smem:[#allocation6 + $0x281]]
        %v348 = vstv %s347
        %v349 = vmul.f32 %v235, %v348
        %v350 = vadd.f32 %v346, %v349
        %s351 = sld [smem:[#allocation6 + $0x282]]
        %v352 = vstv %s351
        %v353 = vmul.f32 %v237, %v352
        %v354 = vadd.f32 %v350, %v353
        %s355 = sld [smem:[#allocation6 + $0x283]]
        %v356 = vstv %s355
        %v357 = vmul.f32 %v239, %v356
        %v358 = vadd.f32 %v354, %v357
        %s359 = sld [smem:[#allocation7 + $0x5]]
        %v360 = vstv %s359
        %v361 = vadd.f32 %v358, %v360
        %v362 = vmax.f32 %v361, 0.0
        %s363 = scalar_lea.vmem %s232, 10 [#allocation9]
        %364 = vst [vmem:[%s363] sm:$0x3] %v362
        %s365 = sld [smem:[#allocation6 + $0x300]]
        %v366 = vstv %s365
        %v367 = vmul.f32 %v233, %v366
        %s368 = sld [smem:[#allocation6 + $0x301]]
        %v369 = vstv %s368
        %v370 = vmul.f32 %v235, %v369
        %v371 = vadd.f32 %v367, %v370
        %s372 = sld [smem:[#allocation6 + $0x302]]
        %v373 = vstv %s372
        %v374 = vmul.f32 %v237, %v373
        %v375 = vadd.f32 %v371, %v374
        %s376 = sld [smem:[#allocation6 + $0x303]]
        %v377 = vstv %s376
        %v378 = vmul.f32 %v239, %v377
        %v379 = vadd.f32 %v375, %v378
        %s380 = sld [smem:[#allocation7 + $0x6]]
        %v381 = vstv %s380
        %v382 = vadd.f32 %v379, %v381
        %v383 = vmax.f32 %v382, 0.0
        %s384 = scalar_lea.vmem %s232, 12 [#allocation9]
        %385 = vst [vmem:[%s384] sm:$0x3] %v383
        %s386 = sld [smem:[#allocation6 + $0x380]]
        %v387 = vstv %s386
        %v388 = vmul.f32 %v233, %v387
        %s389 = sld [smem:[#allocation6 + $0x381]]
        %v390 = vstv %s389
        %v391 = vmul.f32 %v235, %v390
        %v392 = vadd.f32 %v388, %v391
        %s393 = sld [smem:[#allocation6 + $0x382]]
        %v394 = vstv %s393
        %v395 = vmul.f32 %v237, %v394
        %v396 = vadd.f32 %v392, %v395
        %s397 = sld [smem:[#allocation6 + $0x383]]
        %v398 = vstv %s397
        %v399 = vmul.f32 %v239, %v398
        %v400 = vadd.f32 %v396, %v399
        %s401 = sld [smem:[#allocation7 + $0x7]]
        %v402 = vstv %s401
        %v403 = vadd.f32 %v400, %v402
        %v404 = vmax.f32 %v403, 0.0
        %s405 = scalar_lea.vmem %s232, 14 [#allocation9]
        %406 = vst [vmem:[%s405] sm:$0x3] %v404
        %s407 = sand.u32 %s114, 1
        %s408 = scalar_lea.sflag [#allocation4], %s407
        %s409 = sand.u32 %s114, 1
        %s410 = smul.addr %s409, 16
        %s411 = scalar_lea.vmem [#allocation9], %s410
        // Predicated region
        $region45: #{tpu_custom_call.1} parent=31 // pred_check
          %p412 = pneg %p124
        $region46: #{tpu_custom_call.1} parent=31 // pred_check_branch
          %414 = sbr.rel (%p412) target = $region48
        $region47: #{tpu_custom_call.1} parent=31 // pred_region
          %s416 = ssub.s32 256, 256
          %417 = vsyncadd %s408, %s416
          %s418 = smul.addr %s26, 8
          %s419 = sadd.s32 %s27, %s418
          %s420 = smul.addr %s419, 32
          %s421 = scalar_lea.hbm %s3, %s420
          %s422 = sshll.u32 %s411, 4
          %s423 = int_to_ptr.vmem [resolvable:$true] %s422
          %428 = dma.vmem_to_hbm [thread:$0]  %s423, 256, %s421, %s408, 32, 32, 2
        $region48: #{tpu_custom_call.1} parent=31 // pred_fallthru
          _
      $region32: #{tpu_custom_call.1} parent=5 // pred_fallthru
        _
      %p429 = scmp.le.s32.totalorder 2, %s17
      // Predicated region
      $region49: #{tpu_custom_call.1} parent=5 // pred_check
        %p430 = pneg %p429
      $region50: #{tpu_custom_call.1} parent=5 // pred_check_branch
        %432 = sbr.rel (%p430) target = $region52
      $region51: #{tpu_custom_call.1} parent=5 // pred_region
        %s433 = ssub.s32 %s17, 2
        // Predicated region
        $region53: #{tpu_custom_call.1} parent=51 // pred_check
          %p434 = pneg %p130
        $region54: #{tpu_custom_call.1} parent=51 // pred_check_branch
          %436 = sbr.rel (%p434) target = $region56
        $region55: #{tpu_custom_call.1} parent=51 // pred_region
          %s437 = sand.u32 %s115, 1
          %s438 = scalar_lea.sflag [#allocation4], %s437
          %s439 = sand.u32 %s115, 1
          %s440 = smul.addr %s439, 16
          %s441 = scalar_lea.vmem [#allocation9], %s440
          %442 = dma.done %s438, 256
        $region56: #{tpu_custom_call.1} parent=51 // pred_fallthru
          _
      $region52: #{tpu_custom_call.1} parent=5 // pred_fallthru
        _
    $region6: #{tpu_custom_call.1} parent=1 // loop_footer
      %s21 = sadd.s32 1, %s17
    $region7: #{tpu_custom_call.1} parent=1 // loop_footer_branch
      %16 = sbr.rel target = $region3
    $region8: #{tpu_custom_call.1} parent=1 // loop_exit
      _
    %443 = vsyncpa [#allocation3], 1
    %s444 = scalar_lea.sflag [#allocation3], 1
    %445 = vsyncpa %s444, 1
    %446 = vsyncpa [#allocation4], 1
    %s447 = scalar_lea.sflag [#allocation4], 1
    %448 = vsyncpa %s447, 1
    %449 = vsyncpa [#allocation5], 1
    %s450 = scalar_lea.sflag [#allocation5], 1
    %451 = vsyncpa %s450, 1
    %452 = vsyncpa [#allocation8], 1

</llo_original>
